<compile_context>
chip_gen: v5e
topology: v5e:2x2
jax: 0.10.0
libtpu: 0.0.40
codegen_flags: <defaults>
</compile_context>

<pallas_src>
import jax
import jax.numpy as jnp
from jax.experimental import pallas as pl
from jax.experimental.pallas import tpu as pltpu

_F = 5              # in/out features of every Linear(5, 5)
_FP = 8             # features padded to the sublane count
_LANE = 128         # lane width
_MAX_TILE = 16384   # max lane tile (8 * 16384 * 4 B = 0.5 MiB per buffer)
_SPLIT_LANES = 2048 # above 2*_SPLIT_LANES lanes, force >=2 grid steps (v7x megacore)


def _folded_affine_kernel(w_ref, b_ref, x_ref, o_ref):
    """y = W_eff @ x + b_eff on a feature-major (8, TB) lane-dense tile.

    x_ref/o_ref: VMEM (8, TB) f32 — rows 0..4 are features, batch along lanes.
    w_ref: VMEM (8, 8) f32, folded weight in (out, in) layout, rows/cols >= 5 are zero.
    b_ref: VMEM (8, 1) f32, folded bias, rows >= 5 are zero.
    """
    x = x_ref[...]                                            # (8, TB)
    w = w_ref[...]                                            # (8, 8)
    b = b_ref[...]                                            # (8, 1)

    # Unrolled broadcast-FMA: acc[co, :] += x[ci, :] * w[co, ci]
    acc = jnp.broadcast_to(x[0:1, :], x.shape) * w[:, 0:1]
    for ci in range(1, _F):
        acc = acc + jnp.broadcast_to(x[ci:ci + 1, :], x.shape) * w[:, ci:ci + 1]

    # Single full (8, TB) unmasked lane-dense store (padded rows are exactly zero
    # because the padded weight rows / bias rows are zero).
    o_ref[...] = acc + b


def _round_up(v, m):
    return ((v + m - 1) // m) * m


def container_child_forward(x, params):
    """ContainerChildModule.forward. x: (B, 5) -> (B, 5)."""
    (w1, b1), (w2, b2), _between = params  # `_between` never affects the returned tensor
    B, F = x.shape
    assert F == _F

    w1 = w1.astype(jnp.float32); b1 = b1.astype(jnp.float32)
    w2 = w2.astype(jnp.float32); b2 = b2.astype(jnp.float32)

    # Fold the live chain x -> L1 -> L2 -> L1 -> L2 into one affine map (tiny 5x5 matmuls,
    # done once in plain JAX outside the kernel).
    w_eff, b_eff = w1, b1
    for (w, b) in ((w2, b2), (w1, b1), (w2, b2)):
        b_eff = w @ b_eff + b
        w_eff = w @ w_eff

    w_pad = jnp.zeros((_FP, _FP), jnp.float32).at[:_F, :_F].set(w_eff)
    b_pad = jnp.zeros((_FP, 1), jnp.float32).at[:_F, 0].set(b_eff)

    # Lane tiling: pad batch only to a multiple of 128, then split into the fewest tiles
    # that fit _MAX_TILE; for large batches force >=2 tiles so both v7x TCs get work.
    bp = _round_up(max(B, 1), _LANE)
    n_tiles = -(-bp // _MAX_TILE)
    if n_tiles == 1 and bp >= 2 * _SPLIT_LANES:
        n_tiles = 2
    tb = _round_up(-(-bp // n_tiles), _LANE)
    bp = n_tiles * tb

    # (B, 5) -> feature-major, lane-dense (8, Bp); zero-padded lanes/rows are sliced away.
    xt = jnp.transpose(x).astype(jnp.float32)
    xt = jnp.pad(xt, ((0, _FP - _F), (0, bp - B)))

    out = pl.pallas_call(
        _folded_affine_kernel,
        out_shape=jax.ShapeDtypeStruct((_FP, bp), jnp.float32),
        grid=(n_tiles,),
        in_specs=[
            pl.BlockSpec((_FP, _FP), lambda i: (0, 0)),   # folded weight (resident)
            pl.BlockSpec((_FP, 1), lambda i: (0, 0)),     # folded bias   (resident)
            pl.BlockSpec((_FP, tb), lambda i: (0, i)),    # input tile
        ],
        out_specs=pl.BlockSpec((_FP, tb), lambda i: (0, i)),
        compiler_params=pltpu.CompilerParams(dimension_semantics=("parallel",)),
    )(w_pad, b_pad, xt)

    return jnp.transpose(out[:_F, :B]).astype(x.dtype)


def make_params():
    """Deterministic params for _sequential[0], _sequential[1], _between (PyTorch-like init)."""
    key = jax.random.PRNGKey(0)
    bound = 1.0 / (_F ** 0.5)
    params = []
    for idx in range(3):
        kw, kb = jax.random.split(jax.random.fold_in(key, idx + 1))
        w = jax.random.uniform(kw, (_F, _F), jnp.float32, -bound, bound)
        b = jax.random.uniform(kb, (_F,), jnp.float32, -bound, bound)
        params.append((w, b))
    return params


def _ref_forward(x, params):
    """Plain-JAX mirror of the exact PyTorch forward (including the dead computations)."""
    (w1, b1), (w2, b2), (w3, b3) = params
    lin = lambda h, w, b: h @ w.T + b
    out = lin(lin(x, w1, b1), w2, b2)     # out = self._sequential(x)
    out = lin(out, w3, b3)                # out = self._between(out)
    out = lin(lin(out, w1, b1), w2, b2)   # for layer in self._sequential: out = layer(out)
    out = lin(lin(x, w1, b1), w2, b2)     # out = self._sequential(x)   (overwrites)
    out = lin(lin(out, w1, b1), w2, b2)   # for layer in self._sequential: out = layer(out)
    return out


if __name__ == "__main__":
    key = jax.random.PRNGKey(0)
    x = jax.random.normal(jax.random.fold_in(key, 123), (2, _F), dtype=jnp.float32)
    params = make_params()

    out = container_child_forward(x, params)
    out = jax.block_until_ready(out)

    assert out.shape == (2, _F), out.shape
    assert bool(jnp.all(jnp.isfinite(out)))

    ref = _ref_forward(x, params)
    assert bool(jnp.allclose(out, ref, rtol=1e-5, atol=1e-5)), (out, ref)

    print("KERNEL_OK")
</pallas_src>

<mosaic_0001>
module attributes {stable_mosaic.version = 11 : i64} {
  func.func @_folded_affine_kernel(%arg0: i32, %arg1: memref<8x8xf32, #tpu.memory_space<vmem>>, %arg2: memref<8x1xf32, #tpu.memory_space<vmem>>, %arg3: memref<8x128xf32, #tpu.memory_space<vmem>>, %arg4: memref<8x128xf32, #tpu.memory_space<vmem>>) attributes {dimension_semantics = [#tpu.dimension_semantics<parallel>], iteration_bounds = array<i64: 1>, scalar_prefetch = 0 : i64, scratch_operands = 0 : i64, tpu.core_type = #tpu.core_type<tc>, window_params = [{pipeline_mode = #tpu.pipeline_mode<synchronous>, transform_indices = @transform_0, window_bounds = array<i64: 8, 8>}, {pipeline_mode = #tpu.pipeline_mode<synchronous>, transform_indices = @transform_1, window_bounds = array<i64: 8, 1>}, {transform_indices = @transform_2, window_bounds = array<i64: 8, 128>}, {transform_indices = @transform_3, window_bounds = array<i64: 8, 128>}]} {
    %c0 = arith.constant 0 : index
    %c0_0 = arith.constant 0 : index
    %0 = vector.load %arg3[%c0, %c0_0] : memref<8x128xf32, #tpu.memory_space<vmem>>, vector<8x128xf32>
    %c0_1 = arith.constant 0 : index
    %c0_2 = arith.constant 0 : index
    %1 = vector.load %arg1[%c0_1, %c0_2] : memref<8x8xf32, #tpu.memory_space<vmem>>, vector<8x8xf32>
    %c0_3 = arith.constant 0 : index
    %c0_4 = arith.constant 0 : index
    %2 = vector.load %arg2[%c0_3, %c0_4] : memref<8x1xf32, #tpu.memory_space<vmem>>, vector<8x1xf32>
    %3 = vector.extract_strided_slice %0 {offsets = [0, 0], sizes = [1, 128], strides = [1, 1]} : vector<8x128xf32> to vector<1x128xf32>
    %4 = vector.shape_cast %3 : vector<1x128xf32> to vector<1x128xf32>
    %5 = vector.broadcast %4 : vector<1x128xf32> to vector<8x128xf32>
    %6 = vector.extract_strided_slice %1 {offsets = [0, 0], sizes = [8, 1], strides = [1, 1]} : vector<8x8xf32> to vector<8x1xf32>
    %7 = vector.broadcast %6 : vector<8x1xf32> to vector<8x128xf32>
    %8 = arith.mulf %5, %7 : vector<8x128xf32>
    %9 = vector.extract_strided_slice %0 {offsets = [1, 0], sizes = [1, 128], strides = [1, 1]} : vector<8x128xf32> to vector<1x128xf32>
    %10 = vector.shape_cast %9 : vector<1x128xf32> to vector<1x128xf32>
    %11 = vector.broadcast %10 : vector<1x128xf32> to vector<8x128xf32>
    %12 = vector.extract_strided_slice %1 {offsets = [0, 1], sizes = [8, 1], strides = [1, 1]} : vector<8x8xf32> to vector<8x1xf32>
    %13 = vector.broadcast %12 : vector<8x1xf32> to vector<8x128xf32>
    %14 = arith.mulf %11, %13 : vector<8x128xf32>
    %15 = arith.addf %8, %14 : vector<8x128xf32>
    %16 = vector.extract_strided_slice %0 {offsets = [2, 0], sizes = [1, 128], strides = [1, 1]} : vector<8x128xf32> to vector<1x128xf32>
    %17 = vector.shape_cast %16 : vector<1x128xf32> to vector<1x128xf32>
    %18 = vector.broadcast %17 : vector<1x128xf32> to vector<8x128xf32>
    %19 = vector.extract_strided_slice %1 {offsets = [0, 2], sizes = [8, 1], strides = [1, 1]} : vector<8x8xf32> to vector<8x1xf32>
    %20 = vector.broadcast %19 : vector<8x1xf32> to vector<8x128xf32>
    %21 = arith.mulf %18, %20 : vector<8x128xf32>
    %22 = arith.addf %15, %21 : vector<8x128xf32>
    %23 = vector.extract_strided_slice %0 {offsets = [3, 0], sizes = [1, 128], strides = [1, 1]} : vector<8x128xf32> to vector<1x128xf32>
    %24 = vector.shape_cast %23 : vector<1x128xf32> to vector<1x128xf32>
    %25 = vector.broadcast %24 : vector<1x128xf32> to vector<8x128xf32>
    %26 = vector.extract_strided_slice %1 {offsets = [0, 3], sizes = [8, 1], strides = [1, 1]} : vector<8x8xf32> to vector<8x1xf32>
    %27 = vector.broadcast %26 : vector<8x1xf32> to vector<8x128xf32>
    %28 = arith.mulf %25, %27 : vector<8x128xf32>
    %29 = arith.addf %22, %28 : vector<8x128xf32>
    %30 = vector.extract_strided_slice %0 {offsets = [4, 0], sizes = [1, 128], strides = [1, 1]} : vector<8x128xf32> to vector<1x128xf32>
    %31 = vector.shape_cast %30 : vector<1x128xf32> to vector<1x128xf32>
    %32 = vector.broadcast %31 : vector<1x128xf32> to vector<8x128xf32>
    %33 = vector.extract_strided_slice %1 {offsets = [0, 4], sizes = [8, 1], strides = [1, 1]} : vector<8x8xf32> to vector<8x1xf32>
    %34 = vector.broadcast %33 : vector<8x1xf32> to vector<8x128xf32>
    %35 = arith.mulf %32, %34 : vector<8x128xf32>
    %36 = arith.addf %29, %35 : vector<8x128xf32>
    %37 = vector.broadcast %2 : vector<8x1xf32> to vector<8x128xf32>
    %38 = arith.addf %36, %37 : vector<8x128xf32>
    %c0_5 = arith.constant 0 : index
    %c0_6 = arith.constant 0 : index
    %39 = vector.load %arg4[%c0_5, %c0_6] : memref<8x128xf32, #tpu.memory_space<vmem>>, vector<8x128xf32>
    tpu.vector_store %arg4[%c0_5, %c0_6], %38 {strides = array<i32>} : memref<8x128xf32, #tpu.memory_space<vmem>>, vector<8x128xf32>,
    return
  }
  func.func @transform_0(%arg0: i32) -> (i32, i32) {
    %c0_i32 = arith.constant 0 : i32
    %c0_i32_0 = arith.constant 0 : i32
    %c0_i32_1 = arith.constant 0 : i32
    return %c0_i32, %c0_i32_0 : i32, i32
  }
  func.func @transform_1(%arg0: i32) -> (i32, i32) {
    %c0_i32 = arith.constant 0 : i32
    %c0_i32_0 = arith.constant 0 : i32
    %c0_i32_1 = arith.constant 0 : i32
    return %c0_i32, %c0_i32_0 : i32, i32
  }
  func.func @transform_2(%arg0: i32) -> (i32, i32) {
    %c0_i32 = arith.constant 0 : i32
    %c0_i32_0 = arith.constant 0 : i32
    return %c0_i32, %arg0 : i32, i32
  }
  func.func @transform_3(%arg0: i32) -> (i32, i32) {
    %c0_i32 = arith.constant 0 : i32
    %c0_i32_0 = arith.constant 0 : i32
    return %c0_i32, %arg0 : i32, i32
  }
}

</mosaic_0001>

<llo_original>
// kernel: tpu_custom_call.1
$region0: #{tpu_custom_call.1}
  #allocation0 [shape = 'u32[]', space=smem, size = 0x4, offset = 0x4, fixed_abs, tag = 'smem constant byte address 0x4 - core index']
  #allocation1 [shape = 'u32[72,128]{1,0:T(1,128)}', space=vmem, size = 0x9000, scoped, tag = 'internal scratch']
  %s0 = inlined_call_operand.vmem [shape: f32[8,8], index: 0, kind: input, shape index: {}]
  %s1 = inlined_call_operand.vmem [shape: f32[8,1], index: 1, kind: input, shape index: {}]
  %s2 = inlined_call_operand.hbm [shape: f32[8,128], index: 2, kind: input, shape index: {}]
  %s3 = inlined_call_operand.hbm [shape: f32[8,128], index: 3, kind: output, shape index: {}]
  %s4 = sld [smem:[#allocation0]]
  $region26: #{tpu_custom_call.1} parent=0
    _
  %s6 = ssub.s32 1, %s4
  %s7 = scalar_select 0, %s6, %s4
  $region1: #{tpu_custom_call.1} parent=0
    #allocation2 [shape = 'u8[4096]{0}', space=vmem, size = 0x1000, scoped, tag = 'input window, operand 2, single buffered']
    #allocation3 [shape = 's32[1]{0}', space=sflag, size = 0x4, scoped, tag = 'scoped memory for tpu_custom_call.1']
    #allocation4 [shape = 's32[1]{0}', space=sflag, size = 0x4, scoped, tag = 'scoped memory for tpu_custom_call.1']
    #allocation5 [shape = 'u8[4096]{0}', space=vmem, size = 0x1000, scoped, tag = 'output window, operand 0, single buffered']
    %8 = vsyncpa [#allocation3], 0
    %9 = vsyncpa [#allocation4], 0
    // Predicated region
    $region2: #{tpu_custom_call.1} parent=1 // pred_check
      _
    $region3: #{tpu_custom_call.1} parent=1 // pred_check_branch
      %11 = sbr.rel (0) target = $region5
    $region4: #{tpu_custom_call.1} parent=1 // pred_region
      _
    $region5: #{tpu_custom_call.1} parent=1 // pred_fallthru
      _
    // Predicated region
    $region6: #{tpu_custom_call.1} parent=1 // pred_check
      _
    $region7: #{tpu_custom_call.1} parent=1 // pred_check_branch
      %13 = sbr.rel (0) target = $region9
    $region8: #{tpu_custom_call.1} parent=1 // pred_region
      _
    $region9: #{tpu_custom_call.1} parent=1 // pred_fallthru
      _
    // Predicated region
    $region10: #{tpu_custom_call.1} parent=1 // pred_check
      _
    $region11: #{tpu_custom_call.1} parent=1 // pred_check_branch
      %15 = sbr.rel (0) target = $region13
    $region12: #{tpu_custom_call.1} parent=1 // pred_region
      %17 = vsyncadd [#allocation3], 0
      %s19 = sshll.u32 %s2, 4
      %s20 = int_to_ptr.hbm [resolvable:$true] %s19
      %s21 = sshll.u32 [#allocation2], 4
      %s22 = int_to_ptr.vmem [resolvable:$true] %s21
      %24 = dma.hbm_to_vmem [thread:$0]  %s20, 128, %s22, [#allocation3]
    $region13: #{tpu_custom_call.1} parent=1 // pred_fallthru
      _
    // Predicated region
    $region14: #{tpu_custom_call.1} parent=1 // pred_check
      _
    $region15: #{tpu_custom_call.1} parent=1 // pred_check_branch
      %26 = sbr.rel (0) target = $region17
    $region16: #{tpu_custom_call.1} parent=1 // pred_region
      %28 = dma.done [#allocation3], 128
    $region17: #{tpu_custom_call.1} parent=1 // pred_fallthru
      _
    %v29 = vld [vmem:[#allocation2] sm:$0xff]
    %v30 = vld [vmem:[%s0] sm:$0xff]
    %v31 = vld [vmem:[%s1] sm:$0xff]
    %v32 = vperm.slane %v29, 0
    %34 = vset.pattern.permute.xlu0 0
    %35 = vperm.xlu0 %34, %v30
    %v36 = vpop.permute.xlu0 %35
    %v38 = vmul.f32 %v32, %v36
    %v39 = vperm.slane %v29, 1
    %40 = vset.pattern.permute.xlu0 1
    %41 = vperm.xlu0 %40, %v30
    %v42 = vpop.permute.xlu0 %41
    %v44 = vmul.f32 %v39, %v42
    %v45 = vadd.f32 %v38, %v44
    %v46 = vperm.slane %v29, 2
    %47 = vset.pattern.permute.xlu0 2
    %48 = vperm.xlu0 %47, %v30
    %v49 = vpop.permute.xlu0 %48
    %v51 = vmul.f32 %v46, %v49
    %v52 = vadd.f32 %v45, %v51
    %v53 = vperm.slane %v29, 3
    %54 = vset.pattern.permute.xlu0 3
    %55 = vperm.xlu0 %54, %v30
    %v56 = vpop.permute.xlu0 %55
    %v58 = vmul.f32 %v53, %v56
    %v59 = vadd.f32 %v52, %v58
    %v60 = vperm.slane %v29, 4
    %61 = vset.pattern.permute.xlu0 4
    %62 = vperm.xlu0 %61, %v30
    %v63 = vpop.permute.xlu0 %62
    %v65 = vmul.f32 %v60, %v63
    %v66 = vadd.f32 %v59, %v65
    %68 = vset.pattern.permute.xlu0 0
    %69 = vperm.xlu0 %68, %v31
    %v70 = vpop.permute.xlu0 %69
    %v72 = vadd.f32 %v66, %v70
    %73 = vst [vmem:[#allocation5] sm:$0xff] %v72
    // Predicated region
    $region18: #{tpu_custom_call.1} parent=1 // pred_check
      _
    $region19: #{tpu_custom_call.1} parent=1 // pred_check_branch
      %75 = sbr.rel (0) target = $region21
    $region20: #{tpu_custom_call.1} parent=1 // pred_region
      %77 = vsyncadd [#allocation4], 0
      %s79 = sshll.u32 [#allocation5], 4
      %s80 = int_to_ptr.vmem [resolvable:$true] %s79
      %s81 = sshll.u32 %s3, 4
      %s82 = int_to_ptr.hbm [resolvable:$true] %s81
      %84 = dma.vmem_to_hbm [thread:$0]  %s80, 128, %s82, [#allocation4]
    $region21: #{tpu_custom_call.1} parent=1 // pred_fallthru
      _
    // Predicated region
    $region22: #{tpu_custom_call.1} parent=1 // pred_check
      _
    $region23: #{tpu_custom_call.1} parent=1 // pred_check_branch
      %86 = sbr.rel (0) target = $region25
    $region24: #{tpu_custom_call.1} parent=1 // pred_region
      %88 = dma.done [#allocation4], 128
    $region25: #{tpu_custom_call.1} parent=1 // pred_fallthru
      _
    %89 = vsyncpa [#allocation3], 1
    %90 = vsyncpa [#allocation4], 1

</llo_original>
